<compile_context>
chip_gen: v7x
topology: tpu7x:2x2x1
jax: 0.10.0
libtpu: 0.0.40
codegen_flags: <defaults>
</compile_context>

<pallas_src>
import math

import jax
import jax.numpy as jnp
from jax.experimental import pallas as pl
from jax.experimental.pallas import tpu as pltpu


def _round_up(v, m):
    return ((v + m - 1) // m) * m


# -----------------------------------------------------------------------------
# Kernel: fused (matmul + bias [+ ReLU]) chain over one lane-dense batch tile.
# -----------------------------------------------------------------------------
def _make_chain_kernel(n_layers, relu_flags, D, compute_dtype):
    relu_flags = tuple(relu_flags)

    def kernel(x_ref, w_ref, b_ref, o_ref):
        h = x_ref[...]                                 # (TB, D) f32, zero-padded lanes
        for i in range(n_layers):
            w = w_ref[i * D:(i + 1) * D, :]            # (D, D) static slice of weight slab
            b = b_ref[i:i + 1, :]                      # (1, D) f32 bias row
            lhs = h.astype(compute_dtype)
            h = jnp.dot(lhs, w, preferred_element_type=jnp.float32) + b
            if relu_flags[i]:
                h = jnp.maximum(h, 0.0)
        o_ref[...] = h.astype(o_ref.dtype)             # lane-dense (TB, 128) store

    return kernel


# -----------------------------------------------------------------------------
# Wrapper: pack operands, tile the batch, launch the pallas_call.
# -----------------------------------------------------------------------------
def autoencoder_pallas(x, layer_mats, layer_biases, relu_flags, *,
                       D=128, compute_dtype=jnp.float32):
    """x: (B, L_in) f32. layer_mats[i]: (in_i, out_i). layer_biases[i]: (1, out_i)."""
    B, L_in = x.shape
    n_layers = len(layer_mats)
    out_dim = layer_mats[-1].shape[1]
    assert L_in <= D and out_dim <= D
    assert all(w.shape[0] <= D and w.shape[1] <= D for w in layer_mats)

    # Batch tiling: 128-row tiles for large B (full MXU row occupancy on all
    # generations), otherwise one sublane-aligned tile covering the padded batch.
    TB = 128 if B >= 128 else _round_up(max(B, 1), 8)
    B_pad = _round_up(B, TB)
    grid = (B_pad // TB,)

    # Pack weights into one aligned slab (single DMA, stays resident across batch
    # grid steps since its index_map is constant) and biases into a second slab.
    # Zero padding keeps the padded lanes exactly zero through bias + ReLU.
    w_slab = jnp.zeros((n_layers * D, D), jnp.float32)
    b_slab = jnp.zeros((_round_up(n_layers, 8), D), jnp.float32)
    for i, (w, b) in enumerate(zip(layer_mats, layer_biases)):
        din, dout = w.shape
        w_slab = w_slab.at[i * D:i * D + din, :dout].set(w)
        b_slab = b_slab.at[i, :dout].set(jnp.reshape(b, (-1,)))
    w_slab = w_slab.astype(compute_dtype)

    # Lane-dense, zero-padded input slab.
    x_pad = jnp.zeros((B_pad, D), jnp.float32).at[:B, :L_in].set(x)

    kernel = _make_chain_kernel(n_layers, relu_flags, D, compute_dtype)

    cost = pl.CostEstimate(
        flops=2 * B_pad * D * D * n_layers,
        transcendentals=0,
        bytes_accessed=(x_pad.size * 4
                        + w_slab.size * w_slab.dtype.itemsize
                        + b_slab.size * 4
                        + B_pad * D * 4),
    )

    out = pl.pallas_call(
        kernel,
        out_shape=jax.ShapeDtypeStruct((B_pad, D), jnp.float32),
        grid=grid,
        in_specs=[
            pl.BlockSpec((TB, D), lambda i: (i, 0)),        # batch tile (pipelined)
            pl.BlockSpec(w_slab.shape, lambda i: (0, 0)),   # weight slab (resident)
            pl.BlockSpec(b_slab.shape, lambda i: (0, 0)),   # bias slab (resident)
        ],
        out_specs=pl.BlockSpec((TB, D), lambda i: (i, 0)),
        compiler_params=pltpu.CompilerParams(
            dimension_semantics=("parallel",),              # shard batch tiles across TCs (v7x)
        ),
        cost_estimate=cost,
    )(x_pad, w_slab, b_slab)

    return out[:B, :out_dim]


# -----------------------------------------------------------------------------
# Parameter construction (same lowering as the PyTorch module, unfolded chain).
# -----------------------------------------------------------------------------
def build_params(key, conv1d_n_feats, conv1d_kernel_size, conv1d_stride,
                 n_timestamps, n_encoding_layers, reduction):
    C, K, S = conv1d_n_feats, conv1d_kernel_size, conv1d_stride
    L_in = n_timestamps
    L_out = math.floor((L_in - K) / S + 1)
    L_out_T = (L_out - 1) * S + K
    output_padding = L_in - L_out_T
    L_final = L_out_T + output_padding  # == L_in

    keys = jax.random.split(key, 4 + 4 * n_encoding_layers)
    ki = iter(range(len(keys)))

    def unif(k, shape, fan_in):
        bound = 1.0 / math.sqrt(fan_in)
        return jax.random.uniform(k, shape, jnp.float32, -bound, bound)

    # Conv1d(1, C, K, stride=S): weight (C, 1, K), bias (C,)
    w_conv = unif(keys[next(ki)], (C, 1, K), K)
    b_conv = unif(keys[next(ki)], (C,), K)

    # ConvTranspose1d(C, 1, K, stride=S): weight (C, 1, K), bias (1,)
    w_convT = unif(keys[next(ki)], (C, 1, K), C * K)
    b_convT = unif(keys[next(ki)], (1,), C * K)

    # MLP widths (mirrors the PyTorch __init__)
    mlp_in = C * L_out
    mlp_in_list = [mlp_in]
    enc_dims = [(mlp_in, round(mlp_in * reduction))]
    for _ in range(1, n_encoding_layers):
        mlp_in = round(mlp_in * reduction)
        mlp_in_list.append(mlp_in)
        enc_dims.append((mlp_in, round(mlp_in * reduction)))
    mlp_in_list.append(round(mlp_in * reduction))

    dec_dims = []
    for n in range(n_encoding_layers):
        dec_dims.append((mlp_in_list[-n - 1], mlp_in_list[-n - 2]))

    enc_params, dec_params = [], []
    for (din, dout) in enc_dims:
        W = unif(keys[next(ki)], (dout, din), din)
        b = unif(keys[next(ki)], (dout,), din)
        enc_params.append((W, b))
    for (din, dout) in dec_dims:
        W = unif(keys[next(ki)], (dout, din), din)
        b = unif(keys[next(ki)], (dout,), din)
        dec_params.append((W, b))

    # Lower conv1d (in_channels=1) to a matmul: f_flat = x @ A + bA, channel-major.
    A = jnp.zeros((L_in, C * L_out), jnp.float32)
    bA = jnp.zeros((C * L_out,), jnp.float32)
    for c in range(C):
        for l in range(L_out):
            A = A.at[l * S:l * S + K, c * L_out + l].set(w_conv[c, 0, :])
            bA = bA.at[c * L_out + l].set(b_conv[c])

    # Lower ConvTranspose1d (out_channels=1) to a matmul: r = o_flat @ M + bM.
    M = jnp.zeros((C * L_out, L_final), jnp.float32)
    for c in range(C):
        for l in range(L_out):
            M = M.at[c * L_out + l, l * S:l * S + K].set(w_convT[c, 0, :])
    bM = jnp.full((L_final,), b_convT[0], jnp.float32)

    layer_mats = [A]
    layer_biases = [bA.reshape(1, -1)]
    relu_flags = [False]                       # conv output feeds encoder directly
    for (W, b) in enc_params:
        layer_mats.append(W.T)
        layer_biases.append(b.reshape(1, -1))
        relu_flags.append(True)
    for (W, b) in dec_params:
        layer_mats.append(W.T)
        layer_biases.append(b.reshape(1, -1))
        relu_flags.append(True)
    layer_mats.append(M)
    layer_biases.append(bM.reshape(1, -1))
    relu_flags.append(False)

    return layer_mats, layer_biases, relu_flags


def fold_conv_into_first_linear(layer_mats, layer_biases, relu_flags):
    """Exact algebra: no activation between the conv matmul and encoder linear_0,
    so A @ W0 (and bA @ W0 + b0) can be precomputed offline."""
    assert not relu_flags[0]
    A, bA = layer_mats[0], layer_biases[0]
    W1, b1 = layer_mats[1], layer_biases[1]
    W_fold = A @ W1
    b_fold = bA @ W1 + b1
    return ([W_fold] + list(layer_mats[2:]),
            [b_fold] + list(layer_biases[2:]),
            [relu_flags[1]] + list(relu_flags[2:]))


def reference_forward(x, layer_mats, layer_biases, relu_flags):
    """Pure-JAX reference of the unfolded lowered computation (module semantics)."""
    h = x
    for w, b, r in zip(layer_mats, layer_biases, relu_flags):
        h = h @ w + b
        if r:
            h = jnp.maximum(h, 0.0)
    return h


if __name__ == "__main__":
    conv1d_n_feats = 4
    conv1d_kernel_size = 4
    conv1d_stride = 2
    n_timestamps = 16
    n_encoding_layers = 2
    reduction = 0.5
    B = 2

    key = jax.random.PRNGKey(0)
    pkey, xkey = jax.random.split(key)

    mats, biases, relus = build_params(
        pkey, conv1d_n_feats, conv1d_kernel_size, conv1d_stride,
        n_timestamps, n_encoding_layers, reduction)

    # PyTorch forward takes x of shape (B, n_timestamps) and unsqueezes channel dim.
    x = jax.random.normal(xkey, (B, n_timestamps), jnp.float32)

    # Reference = unfolded chain (exact module semantics).
    ref = reference_forward(x, mats, biases, relus)

    # Kernel uses the constant-folded chain.
    f_mats, f_biases, f_relus = fold_conv_into_first_linear(mats, biases, relus)

    # f32 path (safe on all generations).
    out = jax.block_until_ready(autoencoder_pallas(x, f_mats, f_biases, f_relus))
    assert out.shape == (B, n_timestamps), out.shape
    assert jnp.allclose(out, ref, atol=1e-5, rtol=1e-5), "mismatch vs JAX reference (f32)"

    # bf16 MXU path (v6e/v7x perf option): bf16 matmul inputs, f32 accumulate/bias/ReLU.
    out_bf16 = jax.block_until_ready(
        autoencoder_pallas(x, f_mats, f_biases, f_relus, compute_dtype=jnp.bfloat16))
    assert out_bf16.shape == (B, n_timestamps), out_bf16.shape
    assert jnp.allclose(out_bf16, ref, atol=1e-1, rtol=1e-1), "mismatch vs JAX reference (bf16)"

    print("KERNEL_OK")
</pallas_src>

<mosaic_0001>
module attributes {stable_mosaic.version = 11 : i64} {
  func.func @kernel(%arg0: i32, %arg1: memref<8x128xf32, #tpu.memory_space<vmem>>, %arg2: memref<640x128xf32, #tpu.memory_space<vmem>>, %arg3: memref<8x128xf32, #tpu.memory_space<vmem>>, %arg4: memref<8x128xf32, #tpu.memory_space<vmem>>) attributes {dimension_semantics = [#tpu.dimension_semantics<parallel>], iteration_bounds = array<i64: 1>, scalar_prefetch = 0 : i64, scratch_operands = 0 : i64, tpu.core_type = #tpu.core_type<tc>, window_params = [{transform_indices = @transform_0, window_bounds = array<i64: 8, 128>}, {pipeline_mode = #tpu.pipeline_mode<synchronous>, transform_indices = @transform_1, window_bounds = array<i64: 640, 128>}, {pipeline_mode = #tpu.pipeline_mode<synchronous>, transform_indices = @transform_2, window_bounds = array<i64: 8, 128>}, {transform_indices = @transform_3, window_bounds = array<i64: 8, 128>}]} {
    %c0 = arith.constant 0 : index
    %c0_0 = arith.constant 0 : index
    %0 = vector.load %arg1[%c0, %c0_0] : memref<8x128xf32, #tpu.memory_space<vmem>>, vector<8x128xf32>
    %c0_1 = arith.constant 0 : index
    %c0_2 = arith.constant 0 : index
    %1 = vector.load %arg2[%c0_1, %c0_2] : memref<640x128xf32, #tpu.memory_space<vmem>>, vector<128x128xf32>
    %c0_3 = arith.constant 0 : index
    %c0_4 = arith.constant 0 : index
    %2 = vector.load %arg3[%c0_3, %c0_4] : memref<8x128xf32, #tpu.memory_space<vmem>>, vector<1x128xf32>
    %cst = arith.constant dense<0.000000e+00> : vector<8x128xf32>
    %3 = tpu.matmul %0, %1, %cst {dimension_numbers = #tpu.dot_dimension_numbers<[1], [0], [0], [1], [0, 0, 1, 1], [], []>} : vector<8x128xf32>, vector<128x128xf32>, vector<8x128xf32> -> vector<8x128xf32>
    %4 = vector.broadcast %2 : vector<1x128xf32> to vector<8x128xf32>
    %5 = arith.addf %3, %4 : vector<8x128xf32>
    %cst_5 = arith.constant 0.000000e+00 : f32
    %6 = vector.broadcast %cst_5 : f32 to vector<8x128xf32>
    %7 = arith.maximumf %5, %6 : vector<8x128xf32>
    %c128 = arith.constant 128 : index
    %c0_6 = arith.constant 0 : index
    %8 = vector.load %arg2[%c128, %c0_6] : memref<640x128xf32, #tpu.memory_space<vmem>>, vector<128x128xf32>
    %c1 = arith.constant 1 : index
    %c0_7 = arith.constant 0 : index
    %9 = vector.load %arg3[%c1, %c0_7] : memref<8x128xf32, #tpu.memory_space<vmem>>, vector<1x128xf32>
    %cst_8 = arith.constant dense<0.000000e+00> : vector<8x128xf32>
    %10 = tpu.matmul %7, %8, %cst_8 {dimension_numbers = #tpu.dot_dimension_numbers<[1], [0], [0], [1], [0, 0, 1, 1], [], []>} : vector<8x128xf32>, vector<128x128xf32>, vector<8x128xf32> -> vector<8x128xf32>
    %11 = vector.broadcast %9 : vector<1x128xf32> to vector<8x128xf32>
    %12 = arith.addf %10, %11 : vector<8x128xf32>
    %cst_9 = arith.constant 0.000000e+00 : f32
    %13 = vector.broadcast %cst_9 : f32 to vector<8x128xf32>
    %14 = arith.maximumf %12, %13 : vector<8x128xf32>
    %c256 = arith.constant 256 : index
    %c0_10 = arith.constant 0 : index
    %15 = vector.load %arg2[%c256, %c0_10] : memref<640x128xf32, #tpu.memory_space<vmem>>, vector<128x128xf32>
    %c2 = arith.constant 2 : index
    %c0_11 = arith.constant 0 : index
    %16 = vector.load %arg3[%c2, %c0_11] : memref<8x128xf32, #tpu.memory_space<vmem>>, vector<1x128xf32>
    %cst_12 = arith.constant dense<0.000000e+00> : vector<8x128xf32>
    %17 = tpu.matmul %14, %15, %cst_12 {dimension_numbers = #tpu.dot_dimension_numbers<[1], [0], [0], [1], [0, 0, 1, 1], [], []>} : vector<8x128xf32>, vector<128x128xf32>, vector<8x128xf32> -> vector<8x128xf32>
    %18 = vector.broadcast %16 : vector<1x128xf32> to vector<8x128xf32>
    %19 = arith.addf %17, %18 : vector<8x128xf32>
    %cst_13 = arith.constant 0.000000e+00 : f32
    %20 = vector.broadcast %cst_13 : f32 to vector<8x128xf32>
    %21 = arith.maximumf %19, %20 : vector<8x128xf32>
    %c384 = arith.constant 384 : index
    %c0_14 = arith.constant 0 : index
    %22 = vector.load %arg2[%c384, %c0_14] : memref<640x128xf32, #tpu.memory_space<vmem>>, vector<128x128xf32>
    %c3 = arith.constant 3 : index
    %c0_15 = arith.constant 0 : index
    %23 = vector.load %arg3[%c3, %c0_15] : memref<8x128xf32, #tpu.memory_space<vmem>>, vector<1x128xf32>
    %cst_16 = arith.constant dense<0.000000e+00> : vector<8x128xf32>
    %24 = tpu.matmul %21, %22, %cst_16 {dimension_numbers = #tpu.dot_dimension_numbers<[1], [0], [0], [1], [0, 0, 1, 1], [], []>} : vector<8x128xf32>, vector<128x128xf32>, vector<8x128xf32> -> vector<8x128xf32>
    %25 = vector.broadcast %23 : vector<1x128xf32> to vector<8x128xf32>
    %26 = arith.addf %24, %25 : vector<8x128xf32>
    %cst_17 = arith.constant 0.000000e+00 : f32
    %27 = vector.broadcast %cst_17 : f32 to vector<8x128xf32>
    %28 = arith.maximumf %26, %27 : vector<8x128xf32>
    %c512 = arith.constant 512 : index
    %c0_18 = arith.constant 0 : index
    %29 = vector.load %arg2[%c512, %c0_18] : memref<640x128xf32, #tpu.memory_space<vmem>>, vector<128x128xf32>
    %c4 = arith.constant 4 : index
    %c0_19 = arith.constant 0 : index
    %30 = vector.load %arg3[%c4, %c0_19] : memref<8x128xf32, #tpu.memory_space<vmem>>, vector<1x128xf32>
    %cst_20 = arith.constant dense<0.000000e+00> : vector<8x128xf32>
    %31 = tpu.matmul %28, %29, %cst_20 {dimension_numbers = #tpu.dot_dimension_numbers<[1], [0], [0], [1], [0, 0, 1, 1], [], []>} : vector<8x128xf32>, vector<128x128xf32>, vector<8x128xf32> -> vector<8x128xf32>
    %32 = vector.broadcast %30 : vector<1x128xf32> to vector<8x128xf32>
    %33 = arith.addf %31, %32 : vector<8x128xf32>
    %c0_21 = arith.constant 0 : index
    %c0_22 = arith.constant 0 : index
    %34 = vector.load %arg4[%c0_21, %c0_22] : memref<8x128xf32, #tpu.memory_space<vmem>>, vector<8x128xf32>
    tpu.vector_store %arg4[%c0_21, %c0_22], %33 {strides = array<i32>} : memref<8x128xf32, #tpu.memory_space<vmem>>, vector<8x128xf32>,
    return
  }
  func.func @transform_0(%arg0: i32) -> (i32, i32) {
    %c0_i32 = arith.constant 0 : i32
    %c0_i32_0 = arith.constant 0 : i32
    return %arg0, %c0_i32 : i32, i32
  }
  func.func @transform_1(%arg0: i32) -> (i32, i32) {
    %c0_i32 = arith.constant 0 : i32
    %c0_i32_0 = arith.constant 0 : i32
    %c0_i32_1 = arith.constant 0 : i32
    return %c0_i32, %c0_i32_0 : i32, i32
  }
  func.func @transform_2(%arg0: i32) -> (i32, i32) {
    %c0_i32 = arith.constant 0 : i32
    %c0_i32_0 = arith.constant 0 : i32
    %c0_i32_1 = arith.constant 0 : i32
    return %c0_i32, %c0_i32_0 : i32, i32
  }
  func.func @transform_3(%arg0: i32) -> (i32, i32) {
    %c0_i32 = arith.constant 0 : i32
    %c0_i32_0 = arith.constant 0 : i32
    return %arg0, %c0_i32 : i32, i32
  }
}

</mosaic_0001>

<llo_original>
// kernel: tpu_custom_call.1
$region0: #{tpu_custom_call.1}
  #allocation0 [shape = 'u32[]', space=smem, size = 0x4, offset = 0x4, fixed_abs, tag = 'smem constant byte address 0x4 - core index']
  #allocation1 [shape = 'u32[144,128]{1,0:T(1,128)}', space=vmem, size = 0x12000, scoped, tag = 'internal scratch']
  %s0 = inlined_call_operand.hbm [shape: f32[8,128], index: 0, kind: input, shape index: {}]
  %s1 = inlined_call_operand.hbm [shape: f32[640,128], index: 1, kind: input, shape index: {}]
  %s2 = inlined_call_operand.hbm [shape: f32[8,128], index: 2, kind: input, shape index: {}]
  %s3 = inlined_call_operand.hbm [shape: f32[8,128], index: 3, kind: output, shape index: {}]
  %s4 = sld [smem:[#allocation0]]
  $region34: #{tpu_custom_call.1} parent=0
    _
  %s6 = ssub.s32 1, %s4
  %s7 = scalar_select 0, %s6, %s4
  $region1: #{tpu_custom_call.1} parent=0
    #allocation2 [shape = 'u8[4096]{0}', space=vmem, size = 0x1000, scoped, tag = 'input window, operand 0, single buffered']
    #allocation3 [shape = 's32[1]{0}', space=sflag, size = 0x4, scoped, tag = 'scoped memory for tpu_custom_call.1']
    #allocation4 [shape = 's32[1]{0}', space=sflag, size = 0x4, scoped, tag = 'scoped memory for tpu_custom_call.1']
    #allocation5 [shape = 'u8[327680]{0}', space=vmem, size = 0x50000, scoped, tag = 'input window, operand 1, single buffered']
    #allocation6 [shape = 's32[1]{0}', space=sflag, size = 0x4, scoped, tag = 'scoped memory for tpu_custom_call.1']
    #allocation7 [shape = 'u8[4096]{0}', space=vmem, size = 0x1000, scoped, tag = 'input window, operand 2, single buffered']
    #allocation8 [shape = 'u8[4096]{0}', space=vmem, size = 0x1000, scoped, tag = 'output window, operand 0, single buffered']
    %8 = vsyncpa [#allocation3], 0
    %9 = vsyncpa [#allocation6], 0
    %10 = vsyncpa [#allocation4], 0
    // Predicated region
    $region2: #{tpu_custom_call.1} parent=1 // pred_check
      _
    $region3: #{tpu_custom_call.1} parent=1 // pred_check_branch
      %12 = sbr.rel (0) target = $region5
    $region4: #{tpu_custom_call.1} parent=1 // pred_region
      %s14 = ssub.s32 128, 128
      %15 = vsyncadd [#allocation3], %s14
      %s17 = sshll.u32 [#allocation2], 4
      %s18 = int_to_ptr.vmem [resolvable:$true] %s17
      %20 = dma.hbm_to_vmem [thread:$0]  %s0, 128, %s18, [#allocation3]
    $region5: #{tpu_custom_call.1} parent=1 // pred_fallthru
      _
    // Predicated region
    $region6: #{tpu_custom_call.1} parent=1 // pred_check
      _
    $region7: #{tpu_custom_call.1} parent=1 // pred_check_branch
      %22 = sbr.rel (0) target = $region9
    $region8: #{tpu_custom_call.1} parent=1 // pred_region
      %s24 = ssub.s32 10240, 10240
      %25 = vsyncadd [#allocation6], %s24
      %s26 = sshll.u32 [#allocation5], 4
      %s27 = int_to_ptr.vmem [resolvable:$true] %s26
      %32 = dma.hbm_to_vmem [thread:$0]  %s1, 10240, %s27, [#allocation6], 128, 128, 8
    $region9: #{tpu_custom_call.1} parent=1 // pred_fallthru
      _
    // Predicated region
    $region10: #{tpu_custom_call.1} parent=1 // pred_check
      _
    $region11: #{tpu_custom_call.1} parent=1 // pred_check_branch
      %34 = sbr.rel (0) target = $region13
    $region12: #{tpu_custom_call.1} parent=1 // pred_region
      %s36 = ssub.s32 128, 128
      %37 = vsyncadd [#allocation6], %s36
      %s39 = sshll.u32 [#allocation7], 4
      %s40 = int_to_ptr.vmem [resolvable:$true] %s39
      %42 = dma.hbm_to_vmem [thread:$0]  %s2, 128, %s40, [#allocation6]
    $region13: #{tpu_custom_call.1} parent=1 // pred_fallthru
      _
    // Predicated region
    $region14: #{tpu_custom_call.1} parent=1 // pred_check
      _
    $region15: #{tpu_custom_call.1} parent=1 // pred_check_branch
      %44 = sbr.rel (0) target = $region17
    $region16: #{tpu_custom_call.1} parent=1 // pred_region
      %45 = dma.done [#allocation3], 128
    $region17: #{tpu_custom_call.1} parent=1 // pred_fallthru
      _
    // Predicated region
    $region18: #{tpu_custom_call.1} parent=1 // pred_check
      _
    $region19: #{tpu_custom_call.1} parent=1 // pred_check_branch
      %47 = sbr.rel (0) target = $region21
    $region20: #{tpu_custom_call.1} parent=1 // pred_region
      %48 = dma.done [#allocation6], 10240
    $region21: #{tpu_custom_call.1} parent=1 // pred_fallthru
      _
    // Predicated region
    $region22: #{tpu_custom_call.1} parent=1 // pred_check
      _
    $region23: #{tpu_custom_call.1} parent=1 // pred_check_branch
      %50 = sbr.rel (0) target = $region25
    $region24: #{tpu_custom_call.1} parent=1 // pred_region
      %51 = dma.done [#allocation6], 128
    $region25: #{tpu_custom_call.1} parent=1 // pred_fallthru
      _
    %v52 = vld [vmem:[#allocation2] sm:$0xff]
    %v53 = vld [vmem:[#allocation5] sm:$0xff]
    %v54 = vld [vmem:[#allocation5 + $0x8] sm:$0xff]
    %v55 = vld [vmem:[#allocation5 + $0x10] sm:$0xff]
    %v56 = vld [vmem:[#allocation5 + $0x18] sm:$0xff]
    %v57 = vld [vmem:[#allocation5 + $0x20] sm:$0xff]
    %v58 = vld [vmem:[#allocation5 + $0x28] sm:$0xff]
    %v59 = vld [vmem:[#allocation5 + $0x30] sm:$0xff]
    %v60 = vld [vmem:[#allocation5 + $0x38] sm:$0xff]
    %v61 = vld [vmem:[#allocation5 + $0x40] sm:$0xff]
    %v62 = vld [vmem:[#allocation5 + $0x48] sm:$0xff]
    %v63 = vld [vmem:[#allocation5 + $0x50] sm:$0xff]
    %v64 = vld [vmem:[#allocation5 + $0x58] sm:$0xff]
    %v65 = vld [vmem:[#allocation5 + $0x60] sm:$0xff]
    %v66 = vld [vmem:[#allocation5 + $0x68] sm:$0xff]
    %v67 = vld [vmem:[#allocation5 + $0x70] sm:$0xff]
    %v68 = vld [vmem:[#allocation5 + $0x78] sm:$0xff]
    %v69 = vld [vmem:[#allocation7] sm:$0x1]
    %v70 = vlaneseq
    %v71 = vshrl.u32 %v70, 7
    %v72 = vsub.s32 0, %v71
    %v73 = vrot.slane %v69, %v72
    %74 = vmatprep.subr.mxu0 0.0
    %75 = vmatpush1.msra.mxu0 %v53
    %76 = vmatprep.subr.mxu0 0.0
    %77 = vmatpush1.msra.mxu0 %v54
    %78 = vmatprep.subr.mxu0 0.0
    %79 = vmatpush1.msra.mxu0 %v55
    %80 = vmatprep.subr.mxu0 0.0
    %81 = vmatpush1.msra.mxu0 %v56
    %82 = vmatprep.subr.mxu0 0.0
    %83 = vmatpush1.msra.mxu0 %v57
    %84 = vmatprep.subr.mxu0 0.0
    %85 = vmatpush1.msra.mxu0 %v58
    %86 = vmatprep.subr.mxu0 0.0
    %87 = vmatpush1.msra.mxu0 %v59
    %88 = vmatprep.subr.mxu0 0.0
    %89 = vmatpush1.msra.mxu0 %v60
    %90 = vmatprep.subr.mxu0 0.0
    %91 = vmatpush1.msra.mxu0 %v61
    %92 = vmatprep.subr.mxu0 0.0
    %93 = vmatpush1.msra.mxu0 %v62
    %94 = vmatprep.subr.mxu0 0.0
    %95 = vmatpush1.msra.mxu0 %v63
    %96 = vmatprep.subr.mxu0 0.0
    %97 = vmatpush1.msra.mxu0 %v64
    %98 = vmatprep.subr.mxu0 0.0
    %99 = vmatpush1.msra.mxu0 %v65
    %100 = vmatprep.subr.mxu0 0.0
    %101 = vmatpush1.msra.mxu0 %v66
    %102 = vmatprep.subr.mxu0 0.0
    %103 = vmatpush1.msra.mxu0 %v67
    %104 = vmatprep.subr.mxu0 0.0
    %105 = vmatpush1.msra.mxu0 %v68
    %106 = vmatprep.subr.mxu0 0.0
    %107 = vmatpush1.msra.mxu0 0.0
    %108 = vmatprep.subr.mxu0 0.0
    %109 = vmatpush1.msra.mxu0 0.0
    %110 = vmatprep.subr.mxu0 0.0
    %111 = vmatpush1.msra.mxu0 0.0
    %112 = vmatprep.subr.mxu0 0.0
    %113 = vmatpush1.msra.mxu0 0.0
    %114 = vmatprep.subr.mxu0 0.0
    %115 = vmatpush1.msra.mxu0 0.0
    %116 = vmatprep.subr.mxu0 0.0
    %117 = vmatpush1.msra.mxu0 0.0
    %118 = vmatprep.subr.mxu0 0.0
    %119 = vmatpush1.msra.mxu0 0.0
    %120 = vmatprep.subr.mxu0 0.0
    %121 = vmatpush1.msra.mxu0 0.0
    %122 = vmatprep.subr.mxu0 0.0
    %123 = vmatpush1.msra.mxu0 0.0
    %124 = vmatprep.subr.mxu0 0.0
    %125 = vmatpush1.msra.mxu0 0.0
    %126 = vmatprep.subr.mxu0 0.0
    %127 = vmatpush1.msra.mxu0 0.0
    %128 = vmatprep.subr.mxu0 0.0
    %129 = vmatpush1.msra.mxu0 0.0
    %130 = vmatprep.subr.mxu0 0.0
    %131 = vmatpush1.msra.mxu0 0.0
    %132 = vmatprep.subr.mxu0 0.0
    %133 = vmatpush1.msra.mxu0 0.0
    %134 = vmatprep.subr.mxu0 0.0
    %135 = vmatpush1.msra.mxu0 0.0
    %136 = vmatprep.subr.mxu0 0.0
    %137 = vmatpush1.msra.mxu0 0.0
    %138 = vmatprep.mubr.f32.mxu0 0.0
    %139 = vmatmul.mubr.f32.gmra.mrb[0].mxu0 %v52
    %v140 = vpop.f32.mrb[0].mxu0
    %v141 = vadd.f32 %v73, %v140
    %v142 = vpop.f32.mrb[0].mxu0
    %143 = vdwg.mxu0
    %v144 = vmax.f32 %v141, 0.0
    %v145 = vld [vmem:[#allocation5 + $0x80] sm:$0xff]
    %v146 = vld [vmem:[#allocation5 + $0x88] sm:$0xff]
    %v147 = vld [vmem:[#allocation5 + $0x90] sm:$0xff]
    %v148 = vld [vmem:[#allocation5 + $0x98] sm:$0xff]
    %v149 = vld [vmem:[#allocation5 + $0xa0] sm:$0xff]
    %v150 = vld [vmem:[#allocation5 + $0xa8] sm:$0xff]
    %v151 = vld [vmem:[#allocation5 + $0xb0] sm:$0xff]
    %v152 = vld [vmem:[#allocation5 + $0xb8] sm:$0xff]
    %v153 = vld [vmem:[#allocation5 + $0xc0] sm:$0xff]
    %v154 = vld [vmem:[#allocation5 + $0xc8] sm:$0xff]
    %v155 = vld [vmem:[#allocation5 + $0xd0] sm:$0xff]
    %v156 = vld [vmem:[#allocation5 + $0xd8] sm:$0xff]
    %v157 = vld [vmem:[#allocation5 + $0xe0] sm:$0xff]
    %v158 = vld [vmem:[#allocation5 + $0xe8] sm:$0xff]
    %v159 = vld [vmem:[#allocation5 + $0xf0] sm:$0xff]
    %v160 = vld [vmem:[#allocation5 + $0xf8] sm:$0xff]
    %v161 = vld [vmem:[#allocation7 + $0x1] sm:$0x1]
    %v162 = vlaneseq
    %v163 = vshrl.u32 %v162, 7
    %v164 = vsub.s32 0, %v163
    %v165 = vrot.slane %v161, %v164
    %166 = vmatprep.subr.mxu0 0.0
    %167 = vmatpush1.msra.mxu0 %v145
    %168 = vmatprep.subr.mxu0 0.0
    %169 = vmatpush1.msra.mxu0 %v146
    %170 = vmatprep.subr.mxu0 0.0
    %171 = vmatpush1.msra.mxu0 %v147
    %172 = vmatprep.subr.mxu0 0.0
    %173 = vmatpush1.msra.mxu0 %v148
    %174 = vmatprep.subr.mxu0 0.0
    %175 = vmatpush1.msra.mxu0 %v149
    %176 = vmatprep.subr.mxu0 0.0
    %177 = vmatpush1.msra.mxu0 %v150
    %178 = vmatprep.subr.mxu0 0.0
    %179 = vmatpush1.msra.mxu0 %v151
    %180 = vmatprep.subr.mxu0 0.0
    %181 = vmatpush1.msra.mxu0 %v152
    %182 = vmatprep.subr.mxu0 0.0
    %183 = vmatpush1.msra.mxu0 %v153
    %184 = vmatprep.subr.mxu0 0.0
    %185 = vmatpush1.msra.mxu0 %v154
    %186 = vmatprep.subr.mxu0 0.0
    %187 = vmatpush1.msra.mxu0 %v155
    %188 = vmatprep.subr.mxu0 0.0
    %189 = vmatpush1.msra.mxu0 %v156
    %190 = vmatprep.subr.mxu0 0.0
    %191 = vmatpush1.msra.mxu0 %v157
    %192 = vmatprep.subr.mxu0 0.0
    %193 = vmatpush1.msra.mxu0 %v158
    %194 = vmatprep.subr.mxu0 0.0
    %195 = vmatpush1.msra.mxu0 %v159
    %196 = vmatprep.subr.mxu0 0.0
    %197 = vmatpush1.msra.mxu0 %v160
    %198 = vmatprep.subr.mxu0 0.0
    %199 = vmatpush1.msra.mxu0 0.0
    %200 = vmatprep.subr.mxu0 0.0
    %201 = vmatpush1.msra.mxu0 0.0
    %202 = vmatprep.subr.mxu0 0.0
    %203 = vmatpush1.msra.mxu0 0.0
    %204 = vmatprep.subr.mxu0 0.0
    %205 = vmatpush1.msra.mxu0 0.0
    %206 = vmatprep.subr.mxu0 0.0
    %207 = vmatpush1.msra.mxu0 0.0
    %208 = vmatprep.subr.mxu0 0.0
    %209 = vmatpush1.msra.mxu0 0.0
    %210 = vmatprep.subr.mxu0 0.0
    %211 = vmatpush1.msra.mxu0 0.0
    %212 = vmatprep.subr.mxu0 0.0
    %213 = vmatpush1.msra.mxu0 0.0
    %214 = vmatprep.subr.mxu0 0.0
    %215 = vmatpush1.msra.mxu0 0.0
    %216 = vmatprep.subr.mxu0 0.0
    %217 = vmatpush1.msra.mxu0 0.0
    %218 = vmatprep.subr.mxu0 0.0
    %219 = vmatpush1.msra.mxu0 0.0
    %220 = vmatprep.subr.mxu0 0.0
    %221 = vmatpush1.msra.mxu0 0.0
    %222 = vmatprep.subr.mxu0 0.0
    %223 = vmatpush1.msra.mxu0 0.0
    %224 = vmatprep.subr.mxu0 0.0
    %225 = vmatpush1.msra.mxu0 0.0
    %226 = vmatprep.subr.mxu0 0.0
    %227 = vmatpush1.msra.mxu0 0.0
    %228 = vmatprep.subr.mxu0 0.0
    %229 = vmatpush1.msra.mxu0 0.0
    %230 = vmatprep.mubr.f32.mxu0 0.0
    %231 = vmatmul.mubr.f32.gmra.mrb[0].mxu0 %v144
    %v232 = vpop.f32.mrb[0].mxu0
    %v233 = vadd.f32 %v165, %v232
    %v234 = vpop.f32.mrb[0].mxu0
    %235 = vdwg.mxu0
    %v236 = vmax.f32 %v233, 0.0
    %v237 = vld [vmem:[#allocation5 + $0x100] sm:$0xff]
    %v238 = vld [vmem:[#allocation5 + $0x108] sm:$0xff]
    %v239 = vld [vmem:[#allocation5 + $0x110] sm:$0xff]
    %v240 = vld [vmem:[#allocation5 + $0x118] sm:$0xff]
    %v241 = vld [vmem:[#allocation5 + $0x120] sm:$0xff]
    %v242 = vld [vmem:[#allocation5 + $0x128] sm:$0xff]
    %v243 = vld [vmem:[#allocation5 + $0x130] sm:$0xff]
    %v244 = vld [vmem:[#allocation5 + $0x138] sm:$0xff]
    %v245 = vld [vmem:[#allocation5 + $0x140] sm:$0xff]
    %v246 = vld [vmem:[#allocation5 + $0x148] sm:$0xff]
    %v247 = vld [vmem:[#allocation5 + $0x150] sm:$0xff]
    %v248 = vld [vmem:[#allocation5 + $0x158] sm:$0xff]
    %v249 = vld [vmem:[#allocation5 + $0x160] sm:$0xff]
    %v250 = vld [vmem:[#allocation5 + $0x168] sm:$0xff]
    %v251 = vld [vmem:[#allocation5 + $0x170] sm:$0xff]
    %v252 = vld [vmem:[#allocation5 + $0x178] sm:$0xff]
    %v253 = vld [vmem:[#allocation7 + $0x2] sm:$0x1]
    %v254 = vlaneseq
    %v255 = vshrl.u32 %v254, 7
    %v256 = vsub.s32 0, %v255
    %v257 = vrot.slane %v253, %v256
    %258 = vmatprep.subr.mxu0 0.0
    %259 = vmatpush1.msra.mxu0 %v237
    %260 = vmatprep.subr.mxu0 0.0
    %261 = vmatpush1.msra.mxu0 %v238
    %262 = vmatprep.subr.mxu0 0.0
    %263 = vmatpush1.msra.mxu0 %v239
    %264 = vmatprep.subr.mxu0 0.0
    %265 = vmatpush1.msra.mxu0 %v240
    %266 = vmatprep.subr.mxu0 0.0
    %267 = vmatpush1.msra.mxu0 %v241
    %268 = vmatprep.subr.mxu0 0.0
    %269 = vmatpush1.msra.mxu0 %v242
    %270 = vmatprep.subr.mxu0 0.0
    %271 = vmatpush1.msra.mxu0 %v243
    %272 = vmatprep.subr.mxu0 0.0
    %273 = vmatpush1.msra.mxu0 %v244
    %274 = vmatprep.subr.mxu0 0.0
    %275 = vmatpush1.msra.mxu0 %v245
    %276 = vmatprep.subr.mxu0 0.0
    %277 = vmatpush1.msra.mxu0 %v246
    %278 = vmatprep.subr.mxu0 0.0
    %279 = vmatpush1.msra.mxu0 %v247
    %280 = vmatprep.subr.mxu0 0.0
    %281 = vmatpush1.msra.mxu0 %v248
    %282 = vmatprep.subr.mxu0 0.0
    %283 = vmatpush1.msra.mxu0 %v249
    %284 = vmatprep.subr.mxu0 0.0
    %285 = vmatpush1.msra.mxu0 %v250
    %286 = vmatprep.subr.mxu0 0.0
    %287 = vmatpush1.msra.mxu0 %v251
    %288 = vmatprep.subr.mxu0 0.0
    %289 = vmatpush1.msra.mxu0 %v252
    %290 = vmatprep.subr.mxu0 0.0
    %291 = vmatpush1.msra.mxu0 0.0
    %292 = vmatprep.subr.mxu0 0.0
    %293 = vmatpush1.msra.mxu0 0.0
    %294 = vmatprep.subr.mxu0 0.0
    %295 = vmatpush1.msra.mxu0 0.0
    %296 = vmatprep.subr.mxu0 0.0
    %297 = vmatpush1.msra.mxu0 0.0
    %298 = vmatprep.subr.mxu0 0.0
    %299 = vmatpush1.msra.mxu0 0.0
    %300 = vmatprep.subr.mxu0 0.0
    %301 = vmatpush1.msra.mxu0 0.0
    %302 = vmatprep.subr.mxu0 0.0
    %303 = vmatpush1.msra.mxu0 0.0
    %304 = vmatprep.subr.mxu0 0.0
    %305 = vmatpush1.msra.mxu0 0.0
    %306 = vmatprep.subr.mxu0 0.0
    %307 = vmatpush1.msra.mxu0 0.0
    %308 = vmatprep.subr.mxu0 0.0
    %309 = vmatpush1.msra.mxu0 0.0
    %310 = vmatprep.subr.mxu0 0.0
    %311 = vmatpush1.msra.mxu0 0.0
    %312 = vmatprep.subr.mxu0 0.0
    %313 = vmatpush1.msra.mxu0 0.0
    %314 = vmatprep.subr.mxu0 0.0
    %315 = vmatpush1.msra.mxu0 0.0
    %316 = vmatprep.subr.mxu0 0.0
    %317 = vmatpush1.msra.mxu0 0.0
    %318 = vmatprep.subr.mxu0 0.0
    %319 = vmatpush1.msra.mxu0 0.0
    %320 = vmatprep.subr.mxu0 0.0
    %321 = vmatpush1.msra.mxu0 0.0
    %322 = vmatprep.mubr.f32.mxu0 0.0
    %323 = vmatmul.mubr.f32.gmra.mrb[0].mxu0 %v236
    %v324 = vpop.f32.mrb[0].mxu0
    %v325 = vadd.f32 %v257, %v324
    %v326 = vpop.f32.mrb[0].mxu0
    %327 = vdwg.mxu0
    %v328 = vmax.f32 %v325, 0.0
    %v329 = vld [vmem:[#allocation5 + $0x180] sm:$0xff]
    %v330 = vld [vmem:[#allocation5 + $0x188] sm:$0xff]
    %v331 = vld [vmem:[#allocation5 + $0x190] sm:$0xff]
    %v332 = vld [vmem:[#allocation5 + $0x198] sm:$0xff]
    %v333 = vld [vmem:[#allocation5 + $0x1a0] sm:$0xff]
    %v334 = vld [vmem:[#allocation5 + $0x1a8] sm:$0xff]
    %v335 = vld [vmem:[#allocation5 + $0x1b0] sm:$0xff]
    %v336 = vld [vmem:[#allocation5 + $0x1b8] sm:$0xff]
    %v337 = vld [vmem:[#allocation5 + $0x1c0] sm:$0xff]
    %v338 = vld [vmem:[#allocation5 + $0x1c8] sm:$0xff]
    %v339 = vld [vmem:[#allocation5 + $0x1d0] sm:$0xff]
    %v340 = vld [vmem:[#allocation5 + $0x1d8] sm:$0xff]
    %v341 = vld [vmem:[#allocation5 + $0x1e0] sm:$0xff]
    %v342 = vld [vmem:[#allocation5 + $0x1e8] sm:$0xff]
    %v343 = vld [vmem:[#allocation5 + $0x1f0] sm:$0xff]
    %v344 = vld [vmem:[#allocation5 + $0x1f8] sm:$0xff]
    %v345 = vld [vmem:[#allocation7 + $0x3] sm:$0x1]
    %v346 = vlaneseq
    %v347 = vshrl.u32 %v346, 7
    %v348 = vsub.s32 0, %v347
    %v349 = vrot.slane %v345, %v348
    %350 = vmatprep.subr.mxu0 0.0
    %351 = vmatpush1.msra.mxu0 %v329
    %352 = vmatprep.subr.mxu0 0.0
    %353 = vmatpush1.msra.mxu0 %v330
    %354 = vmatprep.subr.mxu0 0.0
    %355 = vmatpush1.msra.mxu0 %v331
    %356 = vmatprep.subr.mxu0 0.0
    %357 = vmatpush1.msra.mxu0 %v332
    %358 = vmatprep.subr.mxu0 0.0
    %359 = vmatpush1.msra.mxu0 %v333
    %360 = vmatprep.subr.mxu0 0.0
    %361 = vmatpush1.msra.mxu0 %v334
    %362 = vmatprep.subr.mxu0 0.0
    %363 = vmatpush1.msra.mxu0 %v335
    %364 = vmatprep.subr.mxu0 0.0
    %365 = vmatpush1.msra.mxu0 %v336
    %366 = vmatprep.subr.mxu0 0.0
    %367 = vmatpush1.msra.mxu0 %v337
    %368 = vmatprep.subr.mxu0 0.0
    %369 = vmatpush1.msra.mxu0 %v338
    %370 = vmatprep.subr.mxu0 0.0
    %371 = vmatpush1.msra.mxu0 %v339
    %372 = vmatprep.subr.mxu0 0.0
    %373 = vmatpush1.msra.mxu0 %v340
    %374 = vmatprep.subr.mxu0 0.0
    %375 = vmatpush1.msra.mxu0 %v341
    %376 = vmatprep.subr.mxu0 0.0
    %377 = vmatpush1.msra.mxu0 %v342
    %378 = vmatprep.subr.mxu0 0.0
    %379 = vmatpush1.msra.mxu0 %v343
    %380 = vmatprep.subr.mxu0 0.0
    %381 = vmatpush1.msra.mxu0 %v344
    %382 = vmatprep.subr.mxu0 0.0
    %383 = vmatpush1.msra.mxu0 0.0
    %384 = vmatprep.subr.mxu0 0.0
    %385 = vmatpush1.msra.mxu0 0.0
    %386 = vmatprep.subr.mxu0 0.0
    %387 = vmatpush1.msra.mxu0 0.0
    %388 = vmatprep.subr.mxu0 0.0
    %389 = vmatpush1.msra.mxu0 0.0
    %390 = vmatprep.subr.mxu0 0.0
    %391 = vmatpush1.msra.mxu0 0.0
    %392 = vmatprep.subr.mxu0 0.0
    %393 = vmatpush1.msra.mxu0 0.0
    %394 = vmatprep.subr.mxu0 0.0
    %395 = vmatpush1.msra.mxu0 0.0
    %396 = vmatprep.subr.mxu0 0.0
    %397 = vmatpush1.msra.mxu0 0.0
    %398 = vmatprep.subr.mxu0 0.0
    %399 = vmatpush1.msra.mxu0 0.0
    %400 = vmatprep.subr.mxu0 0.0
    %401 = vmatpush1.msra.mxu0 0.0
    %402 = vmatprep.subr.mxu0 0.0
    %403 = vmatpush1.msra.mxu0 0.0
    %404 = vmatprep.subr.mxu0 0.0
    %405 = vmatpush1.msra.mxu0 0.0
    %406 = vmatprep.subr.mxu0 0.0
    %407 = vmatpush1.msra.mxu0 0.0
    %408 = vmatprep.subr.mxu0 0.0
    %409 = vmatpush1.msra.mxu0 0.0
    %410 = vmatprep.subr.mxu0 0.0
    %411 = vmatpush1.msra.mxu0 0.0
    %412 = vmatprep.subr.mxu0 0.0
    %413 = vmatpush1.msra.mxu0 0.0
    %414 = vmatprep.mubr.f32.mxu0 0.0
    %415 = vmatmul.mubr.f32.gmra.mrb[0].mxu0 %v328
    %v416 = vpop.f32.mrb[0].mxu0
    %v417 = vadd.f32 %v349, %v416
    %v418 = vpop.f32.mrb[0].mxu0
    %419 = vdwg.mxu0
    %v420 = vmax.f32 %v417, 0.0
    %v421 = vld [vmem:[#allocation5 + $0x200] sm:$0xff]
    %v422 = vld [vmem:[#allocation5 + $0x208] sm:$0xff]
    %v423 = vld [vmem:[#allocation5 + $0x210] sm:$0xff]
    %v424 = vld [vmem:[#allocation5 + $0x218] sm:$0xff]
    %v425 = vld [vmem:[#allocation5 + $0x220] sm:$0xff]
    %v426 = vld [vmem:[#allocation5 + $0x228] sm:$0xff]
    %v427 = vld [vmem:[#allocation5 + $0x230] sm:$0xff]
    %v428 = vld [vmem:[#allocation5 + $0x238] sm:$0xff]
    %v429 = vld [vmem:[#allocation5 + $0x240] sm:$0xff]
    %v430 = vld [vmem:[#allocation5 + $0x248] sm:$0xff]
    %v431 = vld [vmem:[#allocation5 + $0x250] sm:$0xff]
    %v432 = vld [vmem:[#allocation5 + $0x258] sm:$0xff]
    %v433 = vld [vmem:[#allocation5 + $0x260] sm:$0xff]
    %v434 = vld [vmem:[#allocation5 + $0x268] sm:$0xff]
    %v435 = vld [vmem:[#allocation5 + $0x270] sm:$0xff]
    %v436 = vld [vmem:[#allocation5 + $0x278] sm:$0xff]
    %v437 = vld [vmem:[#allocation7 + $0x4] sm:$0x1]
    %v438 = vlaneseq
    %v439 = vshrl.u32 %v438, 7
    %v440 = vsub.s32 0, %v439
    %v441 = vrot.slane %v437, %v440
    %442 = vmatprep.subr.mxu0 0.0
    %443 = vmatpush1.msra.mxu0 %v421
    %444 = vmatprep.subr.mxu0 0.0
    %445 = vmatpush1.msra.mxu0 %v422
    %446 = vmatprep.subr.mxu0 0.0
    %447 = vmatpush1.msra.mxu0 %v423
    %448 = vmatprep.subr.mxu0 0.0
    %449 = vmatpush1.msra.mxu0 %v424
    %450 = vmatprep.subr.mxu0 0.0
    %451 = vmatpush1.msra.mxu0 %v425
    %452 = vmatprep.subr.mxu0 0.0
    %453 = vmatpush1.msra.mxu0 %v426
    %454 = vmatprep.subr.mxu0 0.0
    %455 = vmatpush1.msra.mxu0 %v427
    %456 = vmatprep.subr.mxu0 0.0
    %457 = vmatpush1.msra.mxu0 %v428
    %458 = vmatprep.subr.mxu0 0.0
    %459 = vmatpush1.msra.mxu0 %v429
    %460 = vmatprep.subr.mxu0 0.0
    %461 = vmatpush1.msra.mxu0 %v430
    %462 = vmatprep.subr.mxu0 0.0
    %463 = vmatpush1.msra.mxu0 %v431
    %464 = vmatprep.subr.mxu0 0.0
    %465 = vmatpush1.msra.mxu0 %v432
    %466 = vmatprep.subr.mxu0 0.0
    %467 = vmatpush1.msra.mxu0 %v433
    %468 = vmatprep.subr.mxu0 0.0
    %469 = vmatpush1.msra.mxu0 %v434
    %470 = vmatprep.subr.mxu0 0.0
    %471 = vmatpush1.msra.mxu0 %v435
    %472 = vmatprep.subr.mxu0 0.0
    %473 = vmatpush1.msra.mxu0 %v436
    %474 = vmatprep.subr.mxu0 0.0
    %475 = vmatpush1.msra.mxu0 0.0
    %476 = vmatprep.subr.mxu0 0.0
    %477 = vmatpush1.msra.mxu0 0.0
    %478 = vmatprep.subr.mxu0 0.0
    %479 = vmatpush1.msra.mxu0 0.0
    %480 = vmatprep.subr.mxu0 0.0
    %481 = vmatpush1.msra.mxu0 0.0
    %482 = vmatprep.subr.mxu0 0.0
    %483 = vmatpush1.msra.mxu0 0.0
    %484 = vmatprep.subr.mxu0 0.0
    %485 = vmatpush1.msra.mxu0 0.0
    %486 = vmatprep.subr.mxu0 0.0
    %487 = vmatpush1.msra.mxu0 0.0
    %488 = vmatprep.subr.mxu0 0.0
    %489 = vmatpush1.msra.mxu0 0.0
    %490 = vmatprep.subr.mxu0 0.0
    %491 = vmatpush1.msra.mxu0 0.0
    %492 = vmatprep.subr.mxu0 0.0
    %493 = vmatpush1.msra.mxu0 0.0
    %494 = vmatprep.subr.mxu0 0.0
    %495 = vmatpush1.msra.mxu0 0.0
    %496 = vmatprep.subr.mxu0 0.0
    %497 = vmatpush1.msra.mxu0 0.0
    %498 = vmatprep.subr.mxu0 0.0
    %499 = vmatpush1.msra.mxu0 0.0
    %500 = vmatprep.subr.mxu0 0.0
    %501 = vmatpush1.msra.mxu0 0.0
    %502 = vmatprep.subr.mxu0 0.0
    %503 = vmatpush1.msra.mxu0 0.0
    %504 = vmatprep.subr.mxu0 0.0
    %505 = vmatpush1.msra.mxu0 0.0
    %506 = vmatprep.mubr.f32.mxu0 0.0
    %507 = vmatmul.mubr.f32.gmra.mrb[0].mxu0 %v420
    %v508 = vpop.f32.mrb[0].mxu0
    %v509 = vadd.f32 %v441, %v508
    %v510 = vpop.f32.mrb[0].mxu0
    %511 = vdwg.mxu0
    %512 = vst [vmem:[#allocation8] sm:$0xff] %v509
    // Predicated region
    $region26: #{tpu_custom_call.1} parent=1 // pred_check
      _
    $region27: #{tpu_custom_call.1} parent=1 // pred_check_branch
      %514 = sbr.rel (0) target = $region29
    $region28: #{tpu_custom_call.1} parent=1 // pred_region
      %s516 = ssub.s32 128, 128
      %517 = vsyncadd [#allocation4], %s516
      %s519 = sshll.u32 [#allocation8], 4
      %s520 = int_to_ptr.vmem [resolvable:$true] %s519
      %522 = dma.vmem_to_hbm [thread:$0]  %s520, 128, %s3, [#allocation4]
    $region29: #{tpu_custom_call.1} parent=1 // pred_fallthru
      _
    // Predicated region
    $region30: #{tpu_custom_call.1} parent=1 // pred_check
      _
    $region31: #{tpu_custom_call.1} parent=1 // pred_check_branch
      %524 = sbr.rel (0) target = $region33
    $region32: #{tpu_custom_call.1} parent=1 // pred_region
      %525 = dma.done [#allocation4], 128
    $region33: #{tpu_custom_call.1} parent=1 // pred_fallthru
      _
    %526 = vsyncpa [#allocation3], 1
    %527 = vsyncpa [#allocation6], 1
    %528 = vsyncpa [#allocation4], 1

</llo_original>
